<compile_context>
chip_gen: v7x
topology: tpu7x:2x2x1
jax: 0.10.0
libtpu: 0.0.40
codegen_flags: <defaults>
</compile_context>

<pallas_src>
import jax
import jax.numpy as jnp
from jax import lax
from jax.experimental import pallas as pl
from jax.experimental.pallas import tpu as pltpu

EPS = 1e-5
_LANE = 128
_SUBLANE = 8
_MAX_TILE_N = 2048


def _round_up(v, m):
    return ((v + m - 1) // m) * m


def _tpu_vmem_capacity_bytes():
    try:
        info_fn = getattr(pltpu, "get_tpu_info", None)
        if info_fn is not None:
            cap = int(getattr(info_fn(), "vmem_capacity_bytes", 0))
            if cap > 0:
                return cap
    except Exception:
        pass
    return 64 * 1024 * 1024          # conservative: v7x physical VMEM per TensorCore


_VMEM_CAPACITY = _tpu_vmem_capacity_bytes()
# ~25% headroom for compiler temporaries: v5e/v6e -> ~96-100 MiB, v7x -> ~48 MiB.
_VMEM_LIMIT_BYTES = min(int(0.75 * _VMEM_CAPACITY), 100 * 1024 * 1024)
# Whole-MLP fusion threshold (entire working set resident in VMEM).
_FUSED_VMEM_BUDGET = min(int(0.45 * _VMEM_CAPACITY), 56 * 1024 * 1024)


# ---------------------------------------------------------------------------
# Path 1: whole-MLP fused kernel (everything in VMEM, single pallas_call)
# ---------------------------------------------------------------------------
def _make_fused_kernel(num_layers, batch_norm):
    per_layer = 4 if batch_norm else 2

    def kernel(x_ref, *refs):
        # refs = [w0, b0, (g0, be0), w1, b1, (g1, be1), ..., o_ref]
        o_ref = refs[-1]
        h = x_ref[...]                                   # f32, matches nn.Linear
        for l in range(num_layers):
            base = l * per_layer
            w = refs[base][...]
            b = refs[base + 1][...]
            h = jnp.dot(h, w, preferred_element_type=jnp.float32) + b
            h = jnp.maximum(h, 0.0)                      # ReLU
            if batch_norm:
                gamma = refs[base + 2][...]
                beta = refs[base + 3][...]
                inv_n = 1.0 / h.shape[0]
                mean = jnp.sum(h, axis=0, keepdims=True) * inv_n
                c = h - mean
                var = jnp.sum(c * c, axis=0, keepdims=True) * inv_n   # biased var
                scale = lax.rsqrt(var + EPS) * gamma     # (1, Cout) precompute
                h = c * scale + beta
        o_ref[...] = h.astype(o_ref.dtype)

    return kernel


def mlp_fused_forward(x, params, batch_norm):
    n, cin0 = x.shape
    cin0_pad = params[0]["w_t"].shape[0]
    cout_last = params[-1]["cout"]
    cout_last_pad = params[-1]["w_t"].shape[1]
    if cin0_pad != cin0:
        x = jnp.pad(x, ((0, 0), (0, cin0_pad - cin0)))

    inputs = [x]
    for p in params:
        inputs += [p["w_t"], p["b"]]
        if batch_norm:
            inputs += [p["gamma"], p["beta"]]

    vmem_spec = pl.BlockSpec(memory_space=pltpu.MemorySpace.VMEM)
    out = pl.pallas_call(
        _make_fused_kernel(len(params), batch_norm),
        out_shape=jax.ShapeDtypeStruct((n, cout_last_pad), jnp.float32),
        in_specs=[vmem_spec] * len(inputs),
        out_specs=vmem_spec,
        compiler_params=pltpu.CompilerParams(vmem_limit_bytes=_VMEM_LIMIT_BYTES),
    )(*inputs)
    return out[:, :cout_last]        # lane-dense padded store in-kernel; slice in XLA


# ---------------------------------------------------------------------------
# Path 2a: batch-tiled, no BatchNorm -> whole layer chain in one pallas_call
# ---------------------------------------------------------------------------
def _make_chain_kernel(num_layers):
    def kernel(x_ref, *refs):
        o_ref = refs[-1]
        h = x_ref[...]
        for l in range(num_layers):
            w = refs[2 * l][...]
            b = refs[2 * l + 1][...]
            h = jnp.maximum(jnp.dot(h, w, preferred_element_type=jnp.float32) + b, 0.0)
        o_ref[...] = h.astype(o_ref.dtype)

    return kernel


# ---------------------------------------------------------------------------
# Path 2b: batch-tiled with exact cross-tile BN statistics
# ---------------------------------------------------------------------------
def _make_stats_kernel(tile_n, tiles_per_core, n_actual, apply_prologue, needs_mask):
    def kernel(*refs):
        if apply_prologue:
            (x_ref, scale_ref, shift_ref, w_ref, b_ref,
             h_ref, sum_ref, sq_ref) = refs
        else:
            x_ref, w_ref, b_ref, h_ref, sum_ref, sq_ref = refs
            scale_ref = shift_ref = None

        # Per-core-split resident accumulators: init on the first inner step.
        @pl.when(pl.program_id(1) == 0)
        def _():
            sum_ref[...] = jnp.zeros_like(sum_ref)
            sq_ref[...] = jnp.zeros_like(sq_ref)

        x = x_ref[...]
        if apply_prologue:                       # previous layer's folded BN affine
            x = x * scale_ref[...] + shift_ref[...]
        h = jnp.dot(x, w_ref[...], preferred_element_type=jnp.float32) + b_ref[...]
        h = jnp.maximum(h, 0.0)
        h_ref[...] = h

        if needs_mask:                           # zero out padded batch rows in stats
            tile_idx = pl.program_id(0) * tiles_per_core + pl.program_id(1)
            rows = tile_idx * tile_n + lax.broadcasted_iota(jnp.int32, (tile_n, 1), 0)
            hm = jnp.where(rows < n_actual, h, 0.0)
        else:
            hm = h
        sum_ref[0:1, :] = sum_ref[0:1, :] + jnp.sum(hm, axis=0, keepdims=True)
        sq_ref[0:1, :] = sq_ref[0:1, :] + jnp.sum(hm * hm, axis=0, keepdims=True)

    return kernel


def _pick_tile_n(n, params, vmem_limit, max_tile=_MAX_TILE_N):
    # Resident weights + per-feature vectors (worst case: whole-chain kernel).
    resident = sum(4 * (p["w_t"].shape[0] * p["w_t"].shape[1] + 3 * p["w_t"].shape[1])
                   for p in params)
    # Bytes per batch row: double-buffered in/out tiles + one live activation/layer.
    per_row = 4 * (2 * params[0]["w_t"].shape[0]
                   + 2 * params[-1]["w_t"].shape[1]
                   + sum(p["w_t"].shape[1] for p in params))
    budget = int(0.6 * vmem_limit) - resident
    if budget <= per_row * _SUBLANE:
        # TODO(synk): stream weight tiles over an output-feature grid axis once a
        #             single layer's weights approach the VMEM limit.
        budget = max(int(0.25 * vmem_limit), per_row * _SUBLANE)
    t = budget // per_row
    t = max(_SUBLANE, min(max_tile, (t // _SUBLANE) * _SUBLANE))
    return int(min(t, _round_up(n, _SUBLANE)))


def mlp_tiled_forward(x, params, batch_norm, tile_n=None, vmem_limit=None):
    n, cin0 = x.shape
    cin0_pad = params[0]["w_t"].shape[0]
    cout_last = params[-1]["cout"]
    cout_last_pad = params[-1]["w_t"].shape[1]
    if vmem_limit is None:
        vmem_limit = _VMEM_LIMIT_BYTES
    if tile_n is None:
        tile_n = _pick_tile_n(n, params, vmem_limit)
    tile_n = max(_SUBLANE, (tile_n // _SUBLANE) * _SUBLANE)

    if cin0_pad != cin0:
        x = jnp.pad(x, ((0, 0), (0, cin0_pad - cin0)))

    # ---------------- no BatchNorm: fused layer chain, one batch sweep ----------
    if not batch_norm:
        n_pad = _round_up(n, tile_n)
        if n_pad != n:
            x = jnp.pad(x, ((0, n_pad - n), (0, 0)))
        num_tiles = n_pad // tile_n

        inputs = [x]
        in_specs = [pl.BlockSpec((tile_n, cin0_pad), lambda i: (i, 0))]
        for p in params:
            cin_p, cout_p = p["w_t"].shape
            inputs += [p["w_t"], p["b"]]
            in_specs += [pl.BlockSpec((cin_p, cout_p), lambda i: (0, 0)),
                         pl.BlockSpec((1, cout_p), lambda i: (0, 0))]

        out = pl.pallas_call(
            _make_chain_kernel(len(params)),
            grid=(num_tiles,),
            in_specs=in_specs,
            out_specs=pl.BlockSpec((tile_n, cout_last_pad), lambda i: (i, 0)),
            out_shape=jax.ShapeDtypeStruct((n_pad, cout_last_pad), jnp.float32),
            compiler_params=pltpu.CompilerParams(
                dimension_semantics=("parallel",),     # megacore split
                vmem_limit_bytes=vmem_limit),
        )(*inputs)
        return out[:n, :cout_last]

    # ---------------- BatchNorm: per-layer sweep with folded BN affine ----------
    num_tiles = -(-n // tile_n)
    num_splits = 2 if num_tiles >= 2 else 1            # per-core BN partials on v7x
    tiles_per_core = -(-num_tiles // num_splits)
    n_grid = num_splits * tiles_per_core * tile_n
    if n_grid != n:
        x = jnp.pad(x, ((0, n_grid - n), (0, 0)))
    needs_mask = (n_grid != n)

    h, scale, shift = x, None, None
    for li, p in enumerate(params):
        cin_p, cout_p = p["w_t"].shape
        apply_prologue = li > 0                          # layer 0: scale=1, shift=0 -> skip
        kernel = _make_stats_kernel(tile_n, tiles_per_core, n,
                                    apply_prologue, needs_mask)

        def tile_map(c, i, _tpc=tiles_per_core):
            return (c * _tpc + i, 0)

        rep_map = lambda c, i: (0, 0)
        acc_map = lambda c, i: (c, 0)

        inputs = [h]
        in_specs = [pl.BlockSpec((tile_n, cin_p), tile_map)]
        if apply_prologue:
            inputs += [scale, shift]
            in_specs += [pl.BlockSpec((1, cin_p), rep_map),
                         pl.BlockSpec((1, cin_p), rep_map)]
        inputs += [p["w_t"], p["b"]]
        in_specs += [pl.BlockSpec((cin_p, cout_p), rep_map),
                     pl.BlockSpec((1, cout_p), rep_map)]

        h, s, sq = pl.pallas_call(
            kernel,
            grid=(num_splits, tiles_per_core),
            in_specs=in_specs,
            out_specs=[pl.BlockSpec((tile_n, cout_p), tile_map),
                       pl.BlockSpec((_SUBLANE, cout_p), acc_map),
                       pl.BlockSpec((_SUBLANE, cout_p), acc_map)],
            out_shape=[jax.ShapeDtypeStruct((n_grid, cout_p), jnp.float32),
                       jax.ShapeDtypeStruct((num_splits * _SUBLANE, cout_p), jnp.float32),
                       jax.ShapeDtypeStruct((num_splits * _SUBLANE, cout_p), jnp.float32)],
            compiler_params=pltpu.CompilerParams(
                dimension_semantics=("parallel", "arbitrary"),
                vmem_limit_bytes=vmem_limit),
        )(*inputs)

        # Tiny per-core partial combine in plain XLA (unused accumulator rows are 0).
        mean = jnp.sum(s, axis=0, keepdims=True) / n
        # TODO(synk): single-pass E[h^2]-E[h]^2 can cancel for very large N / large
        #             activations; a shifted or two-pass scheme would be safer.
        var = jnp.maximum(jnp.sum(sq, axis=0, keepdims=True) / n - mean * mean, 0.0)
        scale = p["gamma"] * lax.rsqrt(var + EPS)
        shift = p["beta"] - mean * scale

    # Last layer's BN affine in plain XLA: fuses with the slice / downstream
    # consumer instead of an extra full HBM read+write Pallas pass.
    out = h * scale + shift
    return out[:n, :cout_last]


# ---------------------------------------------------------------------------
# Module wrapper
# ---------------------------------------------------------------------------
class MLP:
    """JAX/Pallas mirror of models/dec.py::MLP (Linear -> ReLU -> BatchNorm1d)."""

    def __init__(self, channels, batch_norm=True, key=None):
        if key is None:
            key = jax.random.PRNGKey(0)
        self.batch_norm = batch_norm
        self.channels = list(channels)
        self.params = []
        for i in range(1, len(channels)):
            cin, cout = channels[i - 1], channels[i]
            cin_pad = _round_up(cin, _LANE)
            cout_pad = _round_up(cout, _LANE)
            key, kw, kb = jax.random.split(key, 3)
            bound = 1.0 / (cin ** 0.5)
            # PyTorch nn.Linear default init: U(-1/sqrt(fan_in), 1/sqrt(fan_in))
            w = jax.random.uniform(kw, (cout, cin), jnp.float32, -bound, bound)
            b = jax.random.uniform(kb, (cout,), jnp.float32, -bound, bound)
            # Zero-padded, pre-transposed (Cin_pad, Cout_pad) weight: lane-dense
            # MXU feeds, no in-kernel transpose, exact (padded lanes stay zero).
            w_t = jnp.zeros((cin_pad, cout_pad), jnp.float32).at[:cin, :cout].set(w.T)
            b_p = jnp.zeros((1, cout_pad), jnp.float32).at[0, :cout].set(b)
            gamma = jnp.zeros((1, cout_pad), jnp.float32).at[0, :cout].set(1.0)
            beta = jnp.zeros((1, cout_pad), jnp.float32)
            self.params.append(dict(w_t=w_t, b=b_p, gamma=gamma, beta=beta,
                                    cin=cin, cout=cout))

    def _fused_vmem_bytes(self, n):
        total = 4 * n * self.params[0]["w_t"].shape[0]            # x (padded lanes)
        for p in self.params:
            cin_p, cout_p = p["w_t"].shape
            total += 4 * (cin_p * cout_p + 3 * cout_p)            # W, b, gamma, beta
            total += 4 * 2 * n * cout_p                           # activation + temps
        return total

    def __call__(self, x):
        n = x.shape[0]
        if self._fused_vmem_bytes(n) <= _FUSED_VMEM_BUDGET:
            return mlp_fused_forward(x, self.params, self.batch_norm)
        return mlp_tiled_forward(x, self.params, self.batch_norm)


def _reference_forward(params, x, batch_norm):
    """Pure-JAX reference of the same forward (for sanity checking)."""
    cin0_pad = params[0]["w_t"].shape[0]
    h = jnp.pad(x, ((0, 0), (0, cin0_pad - x.shape[1])))
    for p in params:
        h = jnp.maximum(h @ p["w_t"] + p["b"], 0.0)
        if batch_norm:
            mean = jnp.mean(h, axis=0, keepdims=True)
            var = jnp.mean((h - mean) ** 2, axis=0, keepdims=True)
            h = (h - mean) * lax.rsqrt(var + EPS) * p["gamma"] + p["beta"]
    return h[:, :params[-1]["cout"]]


if __name__ == "__main__":
    key = jax.random.PRNGKey(0)
    k_in, k_big, k_params = jax.random.split(key, 3)

    channels = [4, 32, 16]          # MLP([4, 32, 16])
    batch = 8
    x = jax.random.normal(k_in, (batch, channels[0]), jnp.float32)

    # 1) fused single-kernel path, with BatchNorm
    mlp = MLP(channels, batch_norm=True, key=k_params)
    y = jax.block_until_ready(mlp(x))
    assert y.shape == (batch, channels[-1])
    assert jnp.allclose(y, _reference_forward(mlp.params, x, True),
                        atol=1e-4, rtol=1e-4)

    # 2) fused single-kernel path, no BatchNorm
    mlp_nobn = MLP(channels, batch_norm=False, key=k_params)
    y2 = jax.block_until_ready(mlp_nobn(x))
    assert jnp.allclose(y2, _reference_forward(mlp_nobn.params, x, False),
                        atol=1e-4, rtol=1e-4)

    # 3) batch-tiled paths (forced small tile, non-divisible batch so the padded /
    #    masked per-core cross-tile BN statistics machinery is exercised)
    x_big = jax.random.normal(k_big, (200, channels[0]), jnp.float32)
    y3 = jax.block_until_ready(mlp_tiled_forward(x_big, mlp.params, True, tile_n=64))
    assert y3.shape == (200, channels[-1])
    assert jnp.allclose(y3, _reference_forward(mlp.params, x_big, True),
                        atol=1e-4, rtol=1e-4)
    y4 = jax.block_until_ready(mlp_tiled_forward(x_big, mlp_nobn.params, False, tile_n=64))
    assert jnp.allclose(y4, _reference_forward(mlp_nobn.params, x_big, False),
                        atol=1e-4, rtol=1e-4)

    print("KERNEL_OK")
</pallas_src>

<mosaic_0001>
module attributes {stable_mosaic.version = 11 : i64} {
  func.func @kernel(%arg0: memref<8x128xf32, #tpu.memory_space<vmem>>, %arg1: memref<128x128xf32, #tpu.memory_space<vmem>>, %arg2: memref<1x128xf32, #tpu.memory_space<vmem>>, %arg3: memref<1x128xf32, #tpu.memory_space<vmem>>, %arg4: memref<1x128xf32, #tpu.memory_space<vmem>>, %arg5: memref<128x128xf32, #tpu.memory_space<vmem>>, %arg6: memref<1x128xf32, #tpu.memory_space<vmem>>, %arg7: memref<1x128xf32, #tpu.memory_space<vmem>>, %arg8: memref<1x128xf32, #tpu.memory_space<vmem>>, %arg9: memref<8x128xf32, #tpu.memory_space<vmem>>) attributes {dimension_semantics = [], scalar_prefetch = 0 : i64, scratch_operands = 0 : i64, tpu.core_type = #tpu.core_type<tc>} {
    %c0 = arith.constant 0 : index
    %c0_0 = arith.constant 0 : index
    %0 = vector.load %arg0[%c0, %c0_0] : memref<8x128xf32, #tpu.memory_space<vmem>>, vector<8x128xf32>
    %c0_1 = arith.constant 0 : index
    %c0_2 = arith.constant 0 : index
    %1 = vector.load %arg1[%c0_1, %c0_2] : memref<128x128xf32, #tpu.memory_space<vmem>>, vector<128x128xf32>
    %c0_3 = arith.constant 0 : index
    %c0_4 = arith.constant 0 : index
    %2 = vector.load %arg2[%c0_3, %c0_4] : memref<1x128xf32, #tpu.memory_space<vmem>>, vector<1x128xf32>
    %cst = arith.constant dense<0.000000e+00> : vector<8x128xf32>
    %3 = tpu.matmul %0, %1, %cst {dimension_numbers = #tpu.dot_dimension_numbers<[1], [0], [0], [1], [0, 0, 1, 1], [], []>} : vector<8x128xf32>, vector<128x128xf32>, vector<8x128xf32> -> vector<8x128xf32>
    %4 = vector.broadcast %2 : vector<1x128xf32> to vector<8x128xf32>
    %5 = arith.addf %3, %4 : vector<8x128xf32>
    %cst_5 = arith.constant 0.000000e+00 : f32
    %6 = vector.broadcast %cst_5 : f32 to vector<8x128xf32>
    %7 = arith.maximumf %5, %6 : vector<8x128xf32>
    %c0_6 = arith.constant 0 : index
    %c0_7 = arith.constant 0 : index
    %8 = vector.load %arg3[%c0_6, %c0_7] : memref<1x128xf32, #tpu.memory_space<vmem>>, vector<1x128xf32>
    %c0_8 = arith.constant 0 : index
    %c0_9 = arith.constant 0 : index
    %9 = vector.load %arg4[%c0_8, %c0_9] : memref<1x128xf32, #tpu.memory_space<vmem>>, vector<1x128xf32>
    %cst_10 = arith.constant dense<0.000000e+00> : vector<128xf32>
    %10 = vector.multi_reduction <add>, %7, %cst_10 [0] : vector<8x128xf32> to vector<128xf32>
    %11 = vector.shape_cast %10 : vector<128xf32> to vector<1x128xf32>
    %cst_11 = arith.constant 1.250000e-01 : f32
    %12 = vector.broadcast %cst_11 : f32 to vector<1x128xf32>
    %13 = arith.mulf %11, %12 : vector<1x128xf32>
    %14 = vector.broadcast %13 : vector<1x128xf32> to vector<8x128xf32>
    %15 = arith.subf %7, %14 : vector<8x128xf32>
    %16 = arith.mulf %15, %15 : vector<8x128xf32>
    %cst_12 = arith.constant dense<0.000000e+00> : vector<128xf32>
    %17 = vector.multi_reduction <add>, %16, %cst_12 [0] : vector<8x128xf32> to vector<128xf32>
    %18 = vector.shape_cast %17 : vector<128xf32> to vector<1x128xf32>
    %cst_13 = arith.constant 1.250000e-01 : f32
    %19 = vector.broadcast %cst_13 : f32 to vector<1x128xf32>
    %20 = arith.mulf %18, %19 : vector<1x128xf32>
    %cst_14 = arith.constant 9.99999974E-6 : f32
    %21 = vector.broadcast %cst_14 : f32 to vector<1x128xf32>
    %22 = arith.addf %20, %21 : vector<1x128xf32>
    %23 = math.rsqrt %22 : vector<1x128xf32>
    %24 = arith.mulf %23, %8 : vector<1x128xf32>
    %25 = vector.broadcast %24 : vector<1x128xf32> to vector<8x128xf32>
    %26 = arith.mulf %15, %25 : vector<8x128xf32>
    %27 = vector.broadcast %9 : vector<1x128xf32> to vector<8x128xf32>
    %28 = arith.addf %26, %27 : vector<8x128xf32>
    %c0_15 = arith.constant 0 : index
    %c0_16 = arith.constant 0 : index
    %29 = vector.load %arg5[%c0_15, %c0_16] : memref<128x128xf32, #tpu.memory_space<vmem>>, vector<128x128xf32>
    %c0_17 = arith.constant 0 : index
    %c0_18 = arith.constant 0 : index
    %30 = vector.load %arg6[%c0_17, %c0_18] : memref<1x128xf32, #tpu.memory_space<vmem>>, vector<1x128xf32>
    %cst_19 = arith.constant dense<0.000000e+00> : vector<8x128xf32>
    %31 = tpu.matmul %28, %29, %cst_19 {dimension_numbers = #tpu.dot_dimension_numbers<[1], [0], [0], [1], [0, 0, 1, 1], [], []>} : vector<8x128xf32>, vector<128x128xf32>, vector<8x128xf32> -> vector<8x128xf32>
    %32 = vector.broadcast %30 : vector<1x128xf32> to vector<8x128xf32>
    %33 = arith.addf %31, %32 : vector<8x128xf32>
    %cst_20 = arith.constant 0.000000e+00 : f32
    %34 = vector.broadcast %cst_20 : f32 to vector<8x128xf32>
    %35 = arith.maximumf %33, %34 : vector<8x128xf32>
    %c0_21 = arith.constant 0 : index
    %c0_22 = arith.constant 0 : index
    %36 = vector.load %arg7[%c0_21, %c0_22] : memref<1x128xf32, #tpu.memory_space<vmem>>, vector<1x128xf32>
    %c0_23 = arith.constant 0 : index
    %c0_24 = arith.constant 0 : index
    %37 = vector.load %arg8[%c0_23, %c0_24] : memref<1x128xf32, #tpu.memory_space<vmem>>, vector<1x128xf32>
    %cst_25 = arith.constant dense<0.000000e+00> : vector<128xf32>
    %38 = vector.multi_reduction <add>, %35, %cst_25 [0] : vector<8x128xf32> to vector<128xf32>
    %39 = vector.shape_cast %38 : vector<128xf32> to vector<1x128xf32>
    %cst_26 = arith.constant 1.250000e-01 : f32
    %40 = vector.broadcast %cst_26 : f32 to vector<1x128xf32>
    %41 = arith.mulf %39, %40 : vector<1x128xf32>
    %42 = vector.broadcast %41 : vector<1x128xf32> to vector<8x128xf32>
    %43 = arith.subf %35, %42 : vector<8x128xf32>
    %44 = arith.mulf %43, %43 : vector<8x128xf32>
    %cst_27 = arith.constant dense<0.000000e+00> : vector<128xf32>
    %45 = vector.multi_reduction <add>, %44, %cst_27 [0] : vector<8x128xf32> to vector<128xf32>
    %46 = vector.shape_cast %45 : vector<128xf32> to vector<1x128xf32>
    %cst_28 = arith.constant 1.250000e-01 : f32
    %47 = vector.broadcast %cst_28 : f32 to vector<1x128xf32>
    %48 = arith.mulf %46, %47 : vector<1x128xf32>
    %cst_29 = arith.constant 9.99999974E-6 : f32
    %49 = vector.broadcast %cst_29 : f32 to vector<1x128xf32>
    %50 = arith.addf %48, %49 : vector<1x128xf32>
    %51 = math.rsqrt %50 : vector<1x128xf32>
    %52 = arith.mulf %51, %36 : vector<1x128xf32>
    %53 = vector.broadcast %52 : vector<1x128xf32> to vector<8x128xf32>
    %54 = arith.mulf %43, %53 : vector<8x128xf32>
    %55 = vector.broadcast %37 : vector<1x128xf32> to vector<8x128xf32>
    %56 = arith.addf %54, %55 : vector<8x128xf32>
    %c0_30 = arith.constant 0 : index
    %c0_31 = arith.constant 0 : index
    %57 = vector.load %arg9[%c0_30, %c0_31] : memref<8x128xf32, #tpu.memory_space<vmem>>, vector<8x128xf32>
    tpu.vector_store %arg9[%c0_30, %c0_31], %56 {strides = array<i32>} : memref<8x128xf32, #tpu.memory_space<vmem>>, vector<8x128xf32>,
    return
  }
}

</mosaic_0001>

<llo_original>
// kernel: tpu_custom_call.1
$region0: #{tpu_custom_call.1}
  #allocation0 [shape = 'u32[]', space=smem, size = 0x4, offset = 0x4, fixed_abs, tag = 'smem constant byte address 0x4 - core index']
  #allocation1 [shape = 'u32[144,128]{1,0:T(1,128)}', space=vmem, size = 0x12000, scoped, tag = 'internal scratch']
  %s0 = inlined_call_operand.hbm [shape: f32[8,128], index: 0, kind: input, shape index: {}]
  %s1 = inlined_call_operand.hbm [shape: f32[128,128], index: 1, kind: input, shape index: {}]
  %s2 = inlined_call_operand.vmem [shape: f32[1,128], index: 2, kind: input, shape index: {}]
  %s3 = inlined_call_operand.vmem [shape: f32[1,128], index: 3, kind: input, shape index: {}]
  %s4 = inlined_call_operand.vmem [shape: f32[1,128], index: 4, kind: input, shape index: {}]
  %s5 = inlined_call_operand.hbm [shape: f32[128,128], index: 5, kind: input, shape index: {}]
  %s6 = inlined_call_operand.vmem [shape: f32[1,128], index: 6, kind: input, shape index: {}]
  %s7 = inlined_call_operand.vmem [shape: f32[1,128], index: 7, kind: input, shape index: {}]
  %s8 = inlined_call_operand.vmem [shape: f32[1,128], index: 8, kind: input, shape index: {}]
  %s9 = inlined_call_operand.hbm [shape: f32[8,128], index: 9, kind: output, shape index: {}]
  %s10 = sld [smem:[#allocation0]]
  $region58: #{tpu_custom_call.1} parent=0
    _
  %s12 = ssub.s32 1, %s10
  %s13 = scalar_select 0, %s12, %s10
  $region1: #{tpu_custom_call.1} parent=0
    #allocation2 [shape = 'u8[4096]{0}', space=vmem, size = 0x1000, scoped, tag = 'input window, operand 0, single buffered']
    #allocation3 [shape = 's32[1]{0}', space=sflag, size = 0x4, scoped, tag = 'scoped memory for tpu_custom_call.1']
    #allocation4 [shape = 's32[1]{0}', space=sflag, size = 0x4, scoped, tag = 'scoped memory for tpu_custom_call.1']
    #allocation5 [shape = 'u8[65536]{0}', space=vmem, size = 0x10000, scoped, tag = 'input window, operand 1, single buffered']
    #allocation6 [shape = 's32[1]{0}', space=sflag, size = 0x4, scoped, tag = 'scoped memory for tpu_custom_call.1']
    #allocation7 [shape = 'u8[65536]{0}', space=vmem, size = 0x10000, scoped, tag = 'input window, operand 5, single buffered']
    #allocation8 [shape = 'u8[4096]{0}', space=vmem, size = 0x1000, scoped, tag = 'output window, operand 0, single buffered']
    %14 = vsyncpa [#allocation3], 0
    %15 = vsyncpa [#allocation6], 0
    %16 = vsyncpa [#allocation4], 0
    // Predicated region
    $region2: #{tpu_custom_call.1} parent=1 // pred_check
      _
    $region3: #{tpu_custom_call.1} parent=1 // pred_check_branch
      %18 = sbr.rel (0) target = $region5
    $region4: #{tpu_custom_call.1} parent=1 // pred_region
      %s20 = ssub.s32 128, 128
      %21 = vsyncadd [#allocation3], %s20
      %s23 = sshll.u32 [#allocation2], 4
      %s24 = int_to_ptr.vmem [resolvable:$true] %s23
      %26 = dma.hbm_to_vmem [thread:$0]  %s0, 128, %s24, [#allocation3]
    $region5: #{tpu_custom_call.1} parent=1 // pred_fallthru
      _
    // Predicated region
    $region6: #{tpu_custom_call.1} parent=1 // pred_check
      _
    $region7: #{tpu_custom_call.1} parent=1 // pred_check_branch
      %28 = sbr.rel (0) target = $region9
    $region8: #{tpu_custom_call.1} parent=1 // pred_region
      %s30 = ssub.s32 2048, 2048
      %31 = vsyncadd [#allocation6], %s30
      %s32 = sshll.u32 [#allocation5], 4
      %s33 = int_to_ptr.vmem [resolvable:$true] %s32
      %38 = dma.hbm_to_vmem [thread:$0]  %s1, 2048, %s33, [#allocation6], 128, 128, 8
    $region9: #{tpu_custom_call.1} parent=1 // pred_fallthru
      _
    // Predicated region
    $region10: #{tpu_custom_call.1} parent=1 // pred_check
      _
    $region11: #{tpu_custom_call.1} parent=1 // pred_check_branch
      %40 = sbr.rel (0) target = $region13
    $region12: #{tpu_custom_call.1} parent=1 // pred_region
      _
    $region13: #{tpu_custom_call.1} parent=1 // pred_fallthru
      _
    // Predicated region
    $region14: #{tpu_custom_call.1} parent=1 // pred_check
      _
    $region15: #{tpu_custom_call.1} parent=1 // pred_check_branch
      %42 = sbr.rel (0) target = $region17
    $region16: #{tpu_custom_call.1} parent=1 // pred_region
      _
    $region17: #{tpu_custom_call.1} parent=1 // pred_fallthru
      _
    // Predicated region
    $region18: #{tpu_custom_call.1} parent=1 // pred_check
      _
    $region19: #{tpu_custom_call.1} parent=1 // pred_check_branch
      %44 = sbr.rel (0) target = $region21
    $region20: #{tpu_custom_call.1} parent=1 // pred_region
      _
    $region21: #{tpu_custom_call.1} parent=1 // pred_fallthru
      _
    // Predicated region
    $region22: #{tpu_custom_call.1} parent=1 // pred_check
      _
    $region23: #{tpu_custom_call.1} parent=1 // pred_check_branch
      %46 = sbr.rel (0) target = $region25
    $region24: #{tpu_custom_call.1} parent=1 // pred_region
      %s48 = ssub.s32 2048, 2048
      %49 = vsyncadd [#allocation6], %s48
      %s50 = sshll.u32 [#allocation7], 4
      %s51 = int_to_ptr.vmem [resolvable:$true] %s50
      %56 = dma.hbm_to_vmem [thread:$0]  %s5, 2048, %s51, [#allocation6], 128, 128, 8
    $region25: #{tpu_custom_call.1} parent=1 // pred_fallthru
      _
    // Predicated region
    $region26: #{tpu_custom_call.1} parent=1 // pred_check
      _
    $region27: #{tpu_custom_call.1} parent=1 // pred_check_branch
      %58 = sbr.rel (0) target = $region29
    $region28: #{tpu_custom_call.1} parent=1 // pred_region
      _
    $region29: #{tpu_custom_call.1} parent=1 // pred_fallthru
      _
    // Predicated region
    $region30: #{tpu_custom_call.1} parent=1 // pred_check
      _
    $region31: #{tpu_custom_call.1} parent=1 // pred_check_branch
      %60 = sbr.rel (0) target = $region33
    $region32: #{tpu_custom_call.1} parent=1 // pred_region
      _
    $region33: #{tpu_custom_call.1} parent=1 // pred_fallthru
      _
    // Predicated region
    $region34: #{tpu_custom_call.1} parent=1 // pred_check
      _
    $region35: #{tpu_custom_call.1} parent=1 // pred_check_branch
      %62 = sbr.rel (0) target = $region37
    $region36: #{tpu_custom_call.1} parent=1 // pred_region
      _
    $region37: #{tpu_custom_call.1} parent=1 // pred_fallthru
      _
    // Predicated region
    $region38: #{tpu_custom_call.1} parent=1 // pred_check
      _
    $region39: #{tpu_custom_call.1} parent=1 // pred_check_branch
      %64 = sbr.rel (0) target = $region41
    $region40: #{tpu_custom_call.1} parent=1 // pred_region
      %65 = dma.done [#allocation3], 128
    $region41: #{tpu_custom_call.1} parent=1 // pred_fallthru
      _
    // Predicated region
    $region42: #{tpu_custom_call.1} parent=1 // pred_check
      _
    $region43: #{tpu_custom_call.1} parent=1 // pred_check_branch
      %67 = sbr.rel (0) target = $region45
    $region44: #{tpu_custom_call.1} parent=1 // pred_region
      %68 = dma.done [#allocation6], 2048
    $region45: #{tpu_custom_call.1} parent=1 // pred_fallthru
      _
    // Predicated region
    $region46: #{tpu_custom_call.1} parent=1 // pred_check
      _
    $region47: #{tpu_custom_call.1} parent=1 // pred_check_branch
      %70 = sbr.rel (0) target = $region49
    $region48: #{tpu_custom_call.1} parent=1 // pred_region
      %71 = dma.done [#allocation6], 2048
    $region49: #{tpu_custom_call.1} parent=1 // pred_fallthru
      _
    %v72 = vld [vmem:[#allocation2] sm:$0xff]
    %v73 = vld [vmem:[#allocation5] sm:$0xff]
    %v74 = vld [vmem:[#allocation5 + $0x8] sm:$0xff]
    %v75 = vld [vmem:[#allocation5 + $0x10] sm:$0xff]
    %v76 = vld [vmem:[#allocation5 + $0x18] sm:$0xff]
    %v77 = vld [vmem:[#allocation5 + $0x20] sm:$0xff]
    %v78 = vld [vmem:[#allocation5 + $0x28] sm:$0xff]
    %v79 = vld [vmem:[#allocation5 + $0x30] sm:$0xff]
    %v80 = vld [vmem:[#allocation5 + $0x38] sm:$0xff]
    %v81 = vld [vmem:[#allocation5 + $0x40] sm:$0xff]
    %v82 = vld [vmem:[#allocation5 + $0x48] sm:$0xff]
    %v83 = vld [vmem:[#allocation5 + $0x50] sm:$0xff]
    %v84 = vld [vmem:[#allocation5 + $0x58] sm:$0xff]
    %v85 = vld [vmem:[#allocation5 + $0x60] sm:$0xff]
    %v86 = vld [vmem:[#allocation5 + $0x68] sm:$0xff]
    %v87 = vld [vmem:[#allocation5 + $0x70] sm:$0xff]
    %v88 = vld [vmem:[#allocation5 + $0x78] sm:$0xff]
    %v89 = vld [vmem:[%s2] sm:$0x1]
    %v91 = vlaneseq
    %v92 = vshrl.u32 %v91, 7
    %v93 = vsub.s32 0, %v92
    %v94 = vrot.slane %v89, %v93
    %96 = vmatprep.subr.mxu0 0.0
    %97 = vmatpush1.msra.mxu0 %v73
    %98 = vmatprep.subr.mxu0 0.0
    %99 = vmatpush1.msra.mxu0 %v74
    %100 = vmatprep.subr.mxu0 0.0
    %101 = vmatpush1.msra.mxu0 %v75
    %102 = vmatprep.subr.mxu0 0.0
    %103 = vmatpush1.msra.mxu0 %v76
    %104 = vmatprep.subr.mxu0 0.0
    %105 = vmatpush1.msra.mxu0 %v77
    %106 = vmatprep.subr.mxu0 0.0
    %107 = vmatpush1.msra.mxu0 %v78
    %108 = vmatprep.subr.mxu0 0.0
    %109 = vmatpush1.msra.mxu0 %v79
    %110 = vmatprep.subr.mxu0 0.0
    %111 = vmatpush1.msra.mxu0 %v80
    %112 = vmatprep.subr.mxu0 0.0
    %113 = vmatpush1.msra.mxu0 %v81
    %114 = vmatprep.subr.mxu0 0.0
    %115 = vmatpush1.msra.mxu0 %v82
    %116 = vmatprep.subr.mxu0 0.0
    %117 = vmatpush1.msra.mxu0 %v83
    %118 = vmatprep.subr.mxu0 0.0
    %119 = vmatpush1.msra.mxu0 %v84
    %120 = vmatprep.subr.mxu0 0.0
    %121 = vmatpush1.msra.mxu0 %v85
    %122 = vmatprep.subr.mxu0 0.0
    %123 = vmatpush1.msra.mxu0 %v86
    %124 = vmatprep.subr.mxu0 0.0
    %125 = vmatpush1.msra.mxu0 %v87
    %126 = vmatprep.subr.mxu0 0.0
    %127 = vmatpush1.msra.mxu0 %v88
    %128 = vmatprep.subr.mxu0 0.0
    %129 = vmatpush1.msra.mxu0 0.0
    %130 = vmatprep.subr.mxu0 0.0
    %131 = vmatpush1.msra.mxu0 0.0
    %132 = vmatprep.subr.mxu0 0.0
    %133 = vmatpush1.msra.mxu0 0.0
    %134 = vmatprep.subr.mxu0 0.0
    %135 = vmatpush1.msra.mxu0 0.0
    %136 = vmatprep.subr.mxu0 0.0
    %137 = vmatpush1.msra.mxu0 0.0
    %138 = vmatprep.subr.mxu0 0.0
    %139 = vmatpush1.msra.mxu0 0.0
    %140 = vmatprep.subr.mxu0 0.0
    %141 = vmatpush1.msra.mxu0 0.0
    %142 = vmatprep.subr.mxu0 0.0
    %143 = vmatpush1.msra.mxu0 0.0
    %144 = vmatprep.subr.mxu0 0.0
    %145 = vmatpush1.msra.mxu0 0.0
    %146 = vmatprep.subr.mxu0 0.0
    %147 = vmatpush1.msra.mxu0 0.0
    %148 = vmatprep.subr.mxu0 0.0
    %149 = vmatpush1.msra.mxu0 0.0
    %150 = vmatprep.subr.mxu0 0.0
    %151 = vmatpush1.msra.mxu0 0.0
    %152 = vmatprep.subr.mxu0 0.0
    %153 = vmatpush1.msra.mxu0 0.0
    %154 = vmatprep.subr.mxu0 0.0
    %155 = vmatpush1.msra.mxu0 0.0
    %156 = vmatprep.subr.mxu0 0.0
    %157 = vmatpush1.msra.mxu0 0.0
    %158 = vmatprep.subr.mxu0 0.0
    %159 = vmatpush1.msra.mxu0 0.0
    %160 = vmatprep.mubr.f32.mxu0 0.0
    %161 = vmatmul.mubr.f32.gmra.mrb[0].mxu0 %v72
    %v162 = vpop.f32.mrb[0].mxu0
    %v163 = vadd.f32 %v94, %v162
    %v164 = vpop.f32.mrb[0].mxu0
    %165 = vdwg.mxu0
    %v166 = vmax.f32 %v163, 0.0
    %v167 = vld [vmem:[%s3] sm:$0x1]
    %v168 = vld [vmem:[%s4] sm:$0x1]
    %v169 = vrot.slane %v166, 4
    %v170 = vadd.f32 %v166, %v169
    %v171 = vrot.slane %v170, 2
    %v172 = vadd.f32 %v170, %v171
    %v173 = vrot.slane %v172, 1
    %v174 = vadd.f32 %v172, %v173
    %v175 = vmul.f32 %v174, 0.125
    %v176 = vsub.f32 %v166, %v175
    %v177 = vmul.f32 %v176, %v176
    %v178 = vrot.slane %v177, 4
    %v179 = vadd.f32 %v177, %v178
    %v180 = vrot.slane %v179, 2
    %v181 = vadd.f32 %v179, %v180
    %v182 = vrot.slane %v181, 1
    %v183 = vadd.f32 %v181, %v182
    %v184 = vmul.f32 %v183, 0.125
    %v185 = vadd.f32 %v184, 1e-05
    %v186 = vrsqrt.pop %v185
    %v187 = vmul.f32 %v186, %v167
    %v188 = vlaneseq
    %v189 = vshrl.u32 %v188, 7
    %v190 = vsub.s32 0, %v189
    %v191 = vrot.slane %v187, %v190
    %v192 = vmul.f32 %v176, %v191
    %v194 = vlaneseq
    %v195 = vshrl.u32 %v194, 7
    %v196 = vsub.s32 0, %v195
    %v197 = vrot.slane %v168, %v196
    %v199 = vadd.f32 %v192, %v197
    %v200 = vld [vmem:[#allocation7] sm:$0xff]
    %v201 = vld [vmem:[#allocation7 + $0x8] sm:$0xff]
    %v202 = vld [vmem:[#allocation7 + $0x10] sm:$0xff]
    %v203 = vld [vmem:[#allocation7 + $0x18] sm:$0xff]
    %v204 = vld [vmem:[#allocation7 + $0x20] sm:$0xff]
    %v205 = vld [vmem:[#allocation7 + $0x28] sm:$0xff]
    %v206 = vld [vmem:[#allocation7 + $0x30] sm:$0xff]
    %v207 = vld [vmem:[#allocation7 + $0x38] sm:$0xff]
    %v208 = vld [vmem:[#allocation7 + $0x40] sm:$0xff]
    %v209 = vld [vmem:[#allocation7 + $0x48] sm:$0xff]
    %v210 = vld [vmem:[#allocation7 + $0x50] sm:$0xff]
    %v211 = vld [vmem:[#allocation7 + $0x58] sm:$0xff]
    %v212 = vld [vmem:[#allocation7 + $0x60] sm:$0xff]
    %v213 = vld [vmem:[#allocation7 + $0x68] sm:$0xff]
    %v214 = vld [vmem:[#allocation7 + $0x70] sm:$0xff]
    %v215 = vld [vmem:[#allocation7 + $0x78] sm:$0xff]
    %v216 = vld [vmem:[%s6] sm:$0x1]
    %v218 = vlaneseq
    %v219 = vshrl.u32 %v218, 7
    %v220 = vsub.s32 0, %v219
    %v221 = vrot.slane %v216, %v220
    %223 = vmatprep.subr.mxu0 0.0
    %224 = vmatpush1.msra.mxu0 %v200
    %225 = vmatprep.subr.mxu0 0.0
    %226 = vmatpush1.msra.mxu0 %v201
    %227 = vmatprep.subr.mxu0 0.0
    %228 = vmatpush1.msra.mxu0 %v202
    %229 = vmatprep.subr.mxu0 0.0
    %230 = vmatpush1.msra.mxu0 %v203
    %231 = vmatprep.subr.mxu0 0.0
    %232 = vmatpush1.msra.mxu0 %v204
    %233 = vmatprep.subr.mxu0 0.0
    %234 = vmatpush1.msra.mxu0 %v205
    %235 = vmatprep.subr.mxu0 0.0
    %236 = vmatpush1.msra.mxu0 %v206
    %237 = vmatprep.subr.mxu0 0.0
    %238 = vmatpush1.msra.mxu0 %v207
    %239 = vmatprep.subr.mxu0 0.0
    %240 = vmatpush1.msra.mxu0 %v208
    %241 = vmatprep.subr.mxu0 0.0
    %242 = vmatpush1.msra.mxu0 %v209
    %243 = vmatprep.subr.mxu0 0.0
    %244 = vmatpush1.msra.mxu0 %v210
    %245 = vmatprep.subr.mxu0 0.0
    %246 = vmatpush1.msra.mxu0 %v211
    %247 = vmatprep.subr.mxu0 0.0
    %248 = vmatpush1.msra.mxu0 %v212
    %249 = vmatprep.subr.mxu0 0.0
    %250 = vmatpush1.msra.mxu0 %v213
    %251 = vmatprep.subr.mxu0 0.0
    %252 = vmatpush1.msra.mxu0 %v214
    %253 = vmatprep.subr.mxu0 0.0
    %254 = vmatpush1.msra.mxu0 %v215
    %255 = vmatprep.subr.mxu0 0.0
    %256 = vmatpush1.msra.mxu0 0.0
    %257 = vmatprep.subr.mxu0 0.0
    %258 = vmatpush1.msra.mxu0 0.0
    %259 = vmatprep.subr.mxu0 0.0
    %260 = vmatpush1.msra.mxu0 0.0
    %261 = vmatprep.subr.mxu0 0.0
    %262 = vmatpush1.msra.mxu0 0.0
    %263 = vmatprep.subr.mxu0 0.0
    %264 = vmatpush1.msra.mxu0 0.0
    %265 = vmatprep.subr.mxu0 0.0
    %266 = vmatpush1.msra.mxu0 0.0
    %267 = vmatprep.subr.mxu0 0.0
    %268 = vmatpush1.msra.mxu0 0.0
    %269 = vmatprep.subr.mxu0 0.0
    %270 = vmatpush1.msra.mxu0 0.0
    %271 = vmatprep.subr.mxu0 0.0
    %272 = vmatpush1.msra.mxu0 0.0
    %273 = vmatprep.subr.mxu0 0.0
    %274 = vmatpush1.msra.mxu0 0.0
    %275 = vmatprep.subr.mxu0 0.0
    %276 = vmatpush1.msra.mxu0 0.0
    %277 = vmatprep.subr.mxu0 0.0
    %278 = vmatpush1.msra.mxu0 0.0
    %279 = vmatprep.subr.mxu0 0.0
    %280 = vmatpush1.msra.mxu0 0.0
    %281 = vmatprep.subr.mxu0 0.0
    %282 = vmatpush1.msra.mxu0 0.0
    %283 = vmatprep.subr.mxu0 0.0
    %284 = vmatpush1.msra.mxu0 0.0
    %285 = vmatprep.subr.mxu0 0.0
    %286 = vmatpush1.msra.mxu0 0.0
    %287 = vmatprep.mubr.f32.mxu0 0.0
    %288 = vmatmul.mubr.f32.gmra.mrb[0].mxu0 %v199
    %v289 = vpop.f32.mrb[0].mxu0
    %v290 = vadd.f32 %v221, %v289
    %v291 = vpop.f32.mrb[0].mxu0
    %292 = vdwg.mxu0
    %v293 = vmax.f32 %v290, 0.0
    %v294 = vld [vmem:[%s7] sm:$0x1]
    %v295 = vld [vmem:[%s8] sm:$0x1]
    %v296 = vrot.slane %v293, 4
    %v297 = vadd.f32 %v293, %v296
    %v298 = vrot.slane %v297, 2
    %v299 = vadd.f32 %v297, %v298
    %v300 = vrot.slane %v299, 1
    %v301 = vadd.f32 %v299, %v300
    %v302 = vmul.f32 %v301, 0.125
    %v303 = vsub.f32 %v293, %v302
    %v304 = vmul.f32 %v303, %v303
    %v305 = vrot.slane %v304, 4
    %v306 = vadd.f32 %v304, %v305
    %v307 = vrot.slane %v306, 2
    %v308 = vadd.f32 %v306, %v307
    %v309 = vrot.slane %v308, 1
    %v310 = vadd.f32 %v308, %v309
    %v311 = vmul.f32 %v310, 0.125
    %v312 = vadd.f32 %v311, 1e-05
    %v313 = vrsqrt.pop %v312
    %v314 = vmul.f32 %v313, %v294
    %v315 = vlaneseq
    %v316 = vshrl.u32 %v315, 7
    %v317 = vsub.s32 0, %v316
    %v318 = vrot.slane %v314, %v317
    %v319 = vmul.f32 %v303, %v318
    %v321 = vlaneseq
    %v322 = vshrl.u32 %v321, 7
    %v323 = vsub.s32 0, %v322
    %v324 = vrot.slane %v295, %v323
    %v326 = vadd.f32 %v319, %v324
    %327 = vst [vmem:[#allocation8] sm:$0xff] %v326
    // Predicated region
    $region50: #{tpu_custom_call.1} parent=1 // pred_check
      _
    $region51: #{tpu_custom_call.1} parent=1 // pred_check_branch
      %329 = sbr.rel (0) target = $region53
    $region52: #{tpu_custom_call.1} parent=1 // pred_region
      %s331 = ssub.s32 128, 128
      %332 = vsyncadd [#allocation4], %s331
      %s334 = sshll.u32 [#allocation8], 4
      %s335 = int_to_ptr.vmem [resolvable:$true] %s334
      %337 = dma.vmem_to_hbm [thread:$0]  %s335, 128, %s9, [#allocation4]
    $region53: #{tpu_custom_call.1} parent=1 // pred_fallthru
      _
    // Predicated region
    $region54: #{tpu_custom_call.1} parent=1 // pred_check
      _
    $region55: #{tpu_custom_call.1} parent=1 // pred_check_branch
      %339 = sbr.rel (0) target = $region57
    $region56: #{tpu_custom_call.1} parent=1 // pred_region
      %340 = dma.done [#allocation4], 128
    $region57: #{tpu_custom_call.1} parent=1 // pred_fallthru
      _
    %341 = vsyncpa [#allocation3], 1
    %342 = vsyncpa [#allocation6], 1
    %343 = vsyncpa [#allocation4], 1

</llo_original>
